<compile_context>
chip_gen: v5e
topology: v5e:2x2
jax: 0.10.0
libtpu: 0.0.40
codegen_flags: <defaults>
</compile_context>

<pallas_src>
import functools

import jax
import jax.numpy as jnp
from jax import lax
from jax.experimental import pallas as pl
from jax.experimental.pallas import tpu as pltpu

LANE = 128
SUBLANE = 8
ACC_ROWS = 64        # per-core accumulator rows -> 8 independent f32 vreg chains
CHUNK_ROWS = 512     # inner fori_loop sub-chunk (multiple of ACC_ROWS)
MAX_BLOCK_BYTES = 8 << 20   # target per-input block size (bandwidth amortization)


def _round_up(x, m):
    return (x + m - 1) // m * m


def _cdiv(a, b):
    return -(-a // b)


def _tpu_query():
    """Return (num_tensorcores, vmem_capacity_bytes) with safe fallbacks."""
    ncores = 1
    vmem_cap = 64 << 20  # conservative (v7x-sized) fallback
    try:
        kind = jax.devices()[0].device_kind.lower()
        # Chips with 2 TensorCores per chip (megacore / dual-TC): v4, v5p, v7x.
        if ("v7" in kind) or ("v5p" in kind) or ("v4" in kind):
            ncores = 2
    except Exception:
        pass
    try:
        info = pltpu.get_tpu_info()
        cap = int(getattr(info, "vmem_capacity_bytes", 0))
        if cap > 0:
            vmem_cap = cap
    except Exception:
        pass
    return ncores, vmem_cap


def _rmse_partial_kernel(yhat_ref, y_ref, out_ref, *, tile_rows, chunk_rows,
                         tiles_per_core, total_tiles, valid_rows,
                         needs_clamp, needs_tail_mask):
    c = pl.program_id(0)   # core / parallel axis
    i = pl.program_id(1)   # row-tile axis (reduction, "arbitrary")

    @pl.when(i == 0)
    def _init():
        out_ref[...] = jnp.zeros_like(out_ref)

    n_chunks = tile_rows // chunk_rows

    def accumulate(mask_rows=None):
        def body(j, acc):
            r0 = pl.multiple_of(j * chunk_rows, chunk_rows)
            a = yhat_ref[pl.ds(r0, chunk_rows), :].astype(jnp.float32)
            b = y_ref[pl.ds(r0, chunk_rows), :].astype(jnp.float32)
            d = a - b
            sq = d * d
            if mask_rows is not None:
                row = r0 + lax.broadcasted_iota(jnp.int32, (chunk_rows, LANE), 0)
                sq = jnp.where(row < mask_rows, sq, jnp.float32(0.0))
            # Sublane fold (chunk_rows, 128) -> (64, 128): pure VPU vreg adds.
            return acc + sq.reshape(chunk_rows // ACC_ROWS, ACC_ROWS, LANE).sum(axis=0)

        acc = lax.fori_loop(0, n_chunks, body,
                            jnp.zeros((ACC_ROWS, LANE), jnp.float32))
        out_ref[0] += acc

    if not (needs_clamp or needs_tail_mask):
        # Steady-state path: no index math, no masking.
        accumulate()
        return

    tile = c * tiles_per_core + i          # intended (unclamped) tile index

    if needs_tail_mask:
        last = total_tiles - 1
        tail_rows = valid_rows - last * tile_rows   # static Python int

        @pl.when(tile < last)
        def _full_tiles():
            accumulate()

        @pl.when(tile == last)
        def _tail_tile():
            accumulate(mask_rows=tail_rows)
        # Clamped duplicate tiles (tile > last) fall through: contribute nothing.
    else:
        @pl.when(tile < total_tiles)
        def _valid_tiles():
            accumulate()


def rmse_loss(yhat, y, reduction="mean"):
    """sqrt(MSELoss(reduction)(yhat, y)); returns a scalar f32."""
    assert yhat.shape == y.shape, "yhat and y must have the same shape"
    assert reduction in ("mean", "sum")
    n = int(yhat.size)
    if n == 0:
        return jnp.float32(0.0)
    denom = float(n) if reduction == "mean" else 1.0

    flat_yhat = jnp.ravel(yhat)
    flat_y = jnp.ravel(y)

    n_main = (n // LANE) * LANE
    tail = n - n_main

    # <128-element ragged tail: sum of squares in plain JAX (avoids a
    # full-array pad copy for the bandwidth-bound kernel path).
    tail_sq = None
    if tail:
        dt = (flat_yhat[n_main:].astype(jnp.float32)
              - flat_y[n_main:].astype(jnp.float32))
        tail_sq = jnp.sum(dt * dt)
        flat_yhat = flat_yhat[:n_main]
        flat_y = flat_y[:n_main]

    rows = n_main // LANE
    if rows == 0:
        total_sq = tail_sq  # everything fit in the tail (n < 128)
    else:
        yhat2d = flat_yhat.reshape(rows, LANE)
        y2d = flat_y.reshape(rows, LANE)

        ncores, vmem_cap = _tpu_query()
        itemsize = jnp.dtype(yhat.dtype).itemsize
        bytes_per_row = LANE * itemsize

        # Byte-budgeted tile: <= MAX_BLOCK_BYTES per input block and keep
        # 2 inputs x 2 pipeline buffers inside ~half of physical VMEM.
        block_bytes_cap = min(MAX_BLOCK_BYTES, (vmem_cap // 2) // 4)
        max_tile_rows = max(ACC_ROWS,
                            (block_bytes_cap // bytes_per_row) // ACC_ROWS * ACC_ROWS)
        tile_rows = min(max_tile_rows, _round_up(rows, ACC_ROWS))
        if tile_rows > CHUNK_ROWS:
            tile_rows = max(CHUNK_ROWS, tile_rows // CHUNK_ROWS * CHUNK_ROWS)
            chunk_rows = CHUNK_ROWS
        else:
            chunk_rows = tile_rows

        total_tiles = _cdiv(rows, tile_rows)
        ncores = max(1, min(ncores, total_tiles))
        tiles_per_core = _cdiv(total_tiles, ncores)
        needs_clamp = (ncores * tiles_per_core) != total_tiles
        needs_tail_mask = (rows % tile_rows) != 0

        if needs_clamp:
            def in_index_map(c, i):
                # Clamp so the DMA never targets a block fully outside the
                # array; the kernel skips the clamped duplicates entirely.
                return (jnp.minimum(c * tiles_per_core + i, total_tiles - 1), 0)
        else:
            def in_index_map(c, i):
                return (c * tiles_per_core + i, 0)

        block_bytes = tile_rows * bytes_per_row
        out_block_bytes = ACC_ROWS * LANE * 4
        needed = 4 * block_bytes + 2 * out_block_bytes + (16 << 20)  # + headroom
        vmem_limit = int(min(vmem_cap, max(needed, 32 << 20)))

        kernel = functools.partial(
            _rmse_partial_kernel,
            tile_rows=tile_rows,
            chunk_rows=chunk_rows,
            tiles_per_core=tiles_per_core,
            total_tiles=total_tiles,
            valid_rows=rows,
            needs_clamp=needs_clamp,
            needs_tail_mask=needs_tail_mask,
        )

        partials = pl.pallas_call(
            kernel,
            out_shape=jax.ShapeDtypeStruct((ncores, ACC_ROWS, LANE), jnp.float32),
            grid=(ncores, tiles_per_core),
            in_specs=[
                pl.BlockSpec((tile_rows, LANE), in_index_map),
                pl.BlockSpec((tile_rows, LANE), in_index_map),
            ],
            out_specs=pl.BlockSpec((1, ACC_ROWS, LANE), lambda c, i: (c, 0, 0)),
            compiler_params=pltpu.CompilerParams(
                dimension_semantics=("parallel", "arbitrary"),
                vmem_limit_bytes=vmem_limit,
            ),
        )(yhat2d, y2d)

        # Tiny final combine (ncores * 64 * 128 elements).
        total_sq = jnp.sum(partials)
        if tail_sq is not None:
            total_sq = total_sq + tail_sq

    return jnp.sqrt(total_sq / jnp.float32(denom))


if __name__ == "__main__":
    key = jax.random.PRNGKey(0)
    k1, k2, k3, k4 = jax.random.split(key, 4)

    # Shapes consistent with a keypoint-heatmap regression use of this loss.
    yhat = jax.random.normal(k1, (2, 4, 16, 16), dtype=jnp.float32)
    y = jax.random.normal(k2, (2, 4, 16, 16), dtype=jnp.float32)
    out = jax.block_until_ready(rmse_loss(yhat, y))
    ref = jnp.sqrt(jnp.mean((yhat - y) ** 2))
    assert jnp.allclose(out, ref, rtol=1e-5, atol=1e-6), (out, ref)

    # Ragged size: exercises the tail-tile mask + plain-JAX lane tail.
    yhat2 = jax.random.normal(k3, (5, 200), dtype=jnp.float32)
    y2 = jax.random.normal(k4, (5, 200), dtype=jnp.float32)
    out2 = jax.block_until_ready(rmse_loss(yhat2, y2))
    ref2 = jnp.sqrt(jnp.mean((yhat2 - y2) ** 2))
    assert jnp.allclose(out2, ref2, rtol=1e-5, atol=1e-6), (out2, ref2)

    print("KERNEL_OK")
</pallas_src>

<mosaic_0001>
module attributes {stable_mosaic.version = 11 : i64} {
  func.func @_rmse_partial_kernel(%arg0: i32, %arg1: i32, %arg2: memref<64x128xf32, #tpu.memory_space<vmem>>, %arg3: memref<64x128xf32, #tpu.memory_space<vmem>>, %arg4: memref<1x64x128xf32, #tpu.memory_space<vmem>>) attributes {dimension_semantics = [#tpu.dimension_semantics<parallel>, #tpu.dimension_semantics<arbitrary>], iteration_bounds = array<i64: 1, 1>, scalar_prefetch = 0 : i64, scratch_operands = 0 : i64, tpu.core_type = #tpu.core_type<tc>, window_params = [{transform_indices = @transform_0, window_bounds = array<i64: 64, 128>}, {transform_indices = @transform_1, window_bounds = array<i64: 64, 128>}, {transform_indices = @transform_2, window_bounds = array<i64: 1, 64, 128>}]} {
    %c0_i32 = arith.constant 0 : i32
    %0 = arith.cmpi eq, %arg1, %c0_i32 : i32
    %1 = arith.extui %0 : i1 to i32
    %c0_i32_0 = arith.constant 0 : i32
    %2 = arith.cmpi ne, %1, %c0_i32_0 : i32
    scf.if %2 {
      %cst = arith.constant 0.000000e+00 : f32
      %11 = vector.broadcast %cst : f32 to vector<1x64x128xf32>
      %c0 = arith.constant 0 : index
      %c0_5 = arith.constant 0 : index
      %c0_6 = arith.constant 0 : index
      %12 = vector.load %arg4[%c0, %c0_5, %c0_6] : memref<1x64x128xf32, #tpu.memory_space<vmem>>, vector<1x64x128xf32>
      tpu.vector_store %arg4[%c0, %c0_5, %c0_6], %11 {strides = array<i32>} : memref<1x64x128xf32, #tpu.memory_space<vmem>>, vector<1x64x128xf32>,
    } else {
    }
    %c1_i32 = arith.constant 1 : i32
    %3 = arith.muli %arg0, %c1_i32 : i32
    %4 = arith.addi %3, %arg1 : i32
    %c0_i32_1 = arith.constant 0 : i32
    %5 = arith.cmpi slt, %4, %c0_i32_1 : i32
    %6 = arith.extui %5 : i1 to i32
    %c0_i32_2 = arith.constant 0 : i32
    %7 = arith.cmpi ne, %6, %c0_i32_2 : i32
    scf.if %7 {
      %cst = arith.constant 0.000000e+00 : f32
      %11 = vector.broadcast %cst : f32 to vector<64x128xf32>
      %c0_i32_5 = arith.constant 0 : i32
      %c64_i32 = arith.constant 64 : i32
      %12 = arith.muli %c0_i32_5, %c64_i32 : i32
      %13 = tpu.assume_multiple %12, 64 : i32
      %14 = arith.index_cast %13 : i32 to index
      %c0 = arith.constant 0 : index
      %15 = vector.load %arg2[%14, %c0] : memref<64x128xf32, #tpu.memory_space<vmem>>, vector<64x128xf32>
      %16 = arith.index_cast %13 : i32 to index
      %c0_6 = arith.constant 0 : index
      %17 = vector.load %arg3[%16, %c0_6] : memref<64x128xf32, #tpu.memory_space<vmem>>, vector<64x128xf32>
      %18 = arith.subf %15, %17 : vector<64x128xf32>
      %19 = arith.mulf %18, %18 : vector<64x128xf32>
      %20 = vector.shape_cast %19 : vector<64x128xf32> to vector<1x64x128xf32>
      %cst_7 = arith.constant dense<0.000000e+00> : vector<64x128xf32>
      %21 = vector.multi_reduction <add>, %20, %cst_7 [0] : vector<1x64x128xf32> to vector<64x128xf32>
      %22 = arith.addf %11, %21 : vector<64x128xf32>
      %c1_i32_8 = arith.constant 1 : i32
      %c0_9 = arith.constant 0 : index
      %c0_10 = arith.constant 0 : index
      %c0_11 = arith.constant 0 : index
      %23 = vector.load %arg4[%c0_9, %c0_10, %c0_11] : memref<1x64x128xf32, #tpu.memory_space<vmem>>, vector<1x64x128xf32>
      %24 = vector.shape_cast %23 : vector<1x64x128xf32> to vector<64x128xf32>
      %25 = arith.addf %24, %22 : vector<64x128xf32>
      %c0_12 = arith.constant 0 : index
      %c0_13 = arith.constant 0 : index
      %c0_14 = arith.constant 0 : index
      %26 = vector.load %arg4[%c0_12, %c0_13, %c0_14] : memref<1x64x128xf32, #tpu.memory_space<vmem>>, vector<1x64x128xf32>
      %27 = vector.shape_cast %26 : vector<1x64x128xf32> to vector<64x128xf32>
      %28 = vector.shape_cast %25 : vector<64x128xf32> to vector<1x64x128xf32>
      tpu.vector_store %arg4[%c0_12, %c0_13, %c0_14], %28 {strides = array<i32>} : memref<1x64x128xf32, #tpu.memory_space<vmem>>, vector<1x64x128xf32>,
    } else {
    }
    %c0_i32_3 = arith.constant 0 : i32
    %8 = arith.cmpi eq, %4, %c0_i32_3 : i32
    %9 = arith.extui %8 : i1 to i32
    %c0_i32_4 = arith.constant 0 : i32
    %10 = arith.cmpi ne, %9, %c0_i32_4 : i32
    scf.if %10 {
      %cst = arith.constant 0.000000e+00 : f32
      %11 = vector.broadcast %cst : f32 to vector<64x128xf32>
      %c0_i32_5 = arith.constant 0 : i32
      %c64_i32 = arith.constant 64 : i32
      %12 = arith.muli %c0_i32_5, %c64_i32 : i32
      %13 = tpu.assume_multiple %12, 64 : i32
      %14 = arith.index_cast %13 : i32 to index
      %c0 = arith.constant 0 : index
      %15 = vector.load %arg2[%14, %c0] : memref<64x128xf32, #tpu.memory_space<vmem>>, vector<64x128xf32>
      %16 = arith.index_cast %13 : i32 to index
      %c0_6 = arith.constant 0 : index
      %17 = vector.load %arg3[%16, %c0_6] : memref<64x128xf32, #tpu.memory_space<vmem>>, vector<64x128xf32>
      %18 = arith.subf %15, %17 : vector<64x128xf32>
      %19 = arith.mulf %18, %18 : vector<64x128xf32>
      %20 = tpu.iota {dimensions = array<i32: 0>} : vector<64x128xi32>
      %21 = vector.broadcast %13 : i32 to vector<64x128xi32>
      %22 = arith.addi %21, %20 : vector<64x128xi32>
      %c16_i32 = arith.constant 16 : i32
      %23 = vector.broadcast %c16_i32 : i32 to vector<64x128xi32>
      %24 = arith.cmpi slt, %22, %23 : vector<64x128xi32>
      %cst_7 = arith.constant 0.000000e+00 : f32
      %25 = vector.broadcast %cst_7 : f32 to vector<64x128xf32>
      %26 = arith.select %24, %19, %25 : vector<64x128xi1>, vector<64x128xf32>
      %27 = vector.shape_cast %26 : vector<64x128xf32> to vector<1x64x128xf32>
      %cst_8 = arith.constant dense<0.000000e+00> : vector<64x128xf32>
      %28 = vector.multi_reduction <add>, %27, %cst_8 [0] : vector<1x64x128xf32> to vector<64x128xf32>
      %29 = arith.addf %11, %28 : vector<64x128xf32>
      %c1_i32_9 = arith.constant 1 : i32
      %c0_10 = arith.constant 0 : index
      %c0_11 = arith.constant 0 : index
      %c0_12 = arith.constant 0 : index
      %30 = vector.load %arg4[%c0_10, %c0_11, %c0_12] : memref<1x64x128xf32, #tpu.memory_space<vmem>>, vector<1x64x128xf32>
      %31 = vector.shape_cast %30 : vector<1x64x128xf32> to vector<64x128xf32>
      %32 = arith.addf %31, %29 : vector<64x128xf32>
      %c0_13 = arith.constant 0 : index
      %c0_14 = arith.constant 0 : index
      %c0_15 = arith.constant 0 : index
      %33 = vector.load %arg4[%c0_13, %c0_14, %c0_15] : memref<1x64x128xf32, #tpu.memory_space<vmem>>, vector<1x64x128xf32>
      %34 = vector.shape_cast %33 : vector<1x64x128xf32> to vector<64x128xf32>
      %35 = vector.shape_cast %32 : vector<64x128xf32> to vector<1x64x128xf32>
      tpu.vector_store %arg4[%c0_13, %c0_14, %c0_15], %35 {strides = array<i32>} : memref<1x64x128xf32, #tpu.memory_space<vmem>>, vector<1x64x128xf32>,
    } else {
    }
    return
  }
  func.func @transform_0(%arg0: i32, %arg1: i32) -> (i32, i32) {
    %c1_i32 = arith.constant 1 : i32
    %0 = arith.muli %arg0, %c1_i32 : i32
    %1 = arith.addi %0, %arg1 : i32
    %c0_i32 = arith.constant 0 : i32
    %c0_i32_0 = arith.constant 0 : i32
    return %1, %c0_i32 : i32, i32
  }
  func.func @transform_1(%arg0: i32, %arg1: i32) -> (i32, i32) {
    %c1_i32 = arith.constant 1 : i32
    %0 = arith.muli %arg0, %c1_i32 : i32
    %1 = arith.addi %0, %arg1 : i32
    %c0_i32 = arith.constant 0 : i32
    %c0_i32_0 = arith.constant 0 : i32
    return %1, %c0_i32 : i32, i32
  }
  func.func @transform_2(%arg0: i32, %arg1: i32) -> (i32, i32, i32) {
    %c0_i32 = arith.constant 0 : i32
    %c0_i32_0 = arith.constant 0 : i32
    %c0_i32_1 = arith.constant 0 : i32
    return %arg0, %c0_i32, %c0_i32_0 : i32, i32, i32
  }
}

</mosaic_0001>

<llo_original>
// kernel: tpu_custom_call.1
$region0: #{tpu_custom_call.1}
  #allocation0 [shape = 'u32[]', space=smem, size = 0x4, offset = 0x4, fixed_abs, tag = 'smem constant byte address 0x4 - core index']
  #allocation1 [shape = 'u32[72,128]{1,0:T(1,128)}', space=vmem, size = 0x9000, scoped, tag = 'internal scratch']
  %s0 = inlined_call_operand.hbm [shape: f32[16,128], index: 0, kind: input, shape index: {}]
  %s1 = inlined_call_operand.hbm [shape: f32[16,128], index: 1, kind: input, shape index: {}]
  %s2 = inlined_call_operand.hbm [shape: f32[1,64,128], index: 2, kind: output, shape index: {}]
  %s3 = sld [smem:[#allocation0]]
  $region38: #{tpu_custom_call.1} parent=0
    _
  %s5 = ssub.s32 1, %s3
  %s6 = scalar_select 0, %s5, %s3
  $region1: #{tpu_custom_call.1} parent=0
    #allocation2 [shape = 'u8[32768]{0}', space=vmem, size = 0x8000, scoped, tag = 'input window, operand 0, single buffered']
    #allocation3 [shape = 's32[1]{0}', space=sflag, size = 0x4, scoped, tag = 'scoped memory for tpu_custom_call.1']
    #allocation4 [shape = 's32[1]{0}', space=sflag, size = 0x4, scoped, tag = 'scoped memory for tpu_custom_call.1']
    #allocation5 [shape = 'u8[32768]{0}', space=vmem, size = 0x8000, scoped, tag = 'input window, operand 1, single buffered']
    #allocation6 [shape = 's32[1]{0}', space=sflag, size = 0x4, scoped, tag = 'scoped memory for tpu_custom_call.1']
    #allocation7 [shape = 'u8[32768]{0}', space=vmem, size = 0x8000, scoped, tag = 'output window, operand 0, single buffered']
    %7 = vsyncpa [#allocation3], 0
    %8 = vsyncpa [#allocation6], 0
    %9 = vsyncpa [#allocation4], 0
    // Predicated region
    $region2: #{tpu_custom_call.1} parent=1 // pred_check
      _
    $region3: #{tpu_custom_call.1} parent=1 // pred_check_branch
      %11 = sbr.rel (0) target = $region5
    $region4: #{tpu_custom_call.1} parent=1 // pred_region
      %s12 = sadd.s32 0, 0
      %s13 = smul.u32 8, %s12
      %s14 = ssub.s32 2, %s13
      %s15 = smul.u32 8, %s14
      %s16 = ssub.s32 64, %s15
      %s17 = sshll.u32 %s16, 4
      %18 = vsyncadd [#allocation3], %s17
      %p19 = scmp.ne.s32.totalorder 0, %s15
      %s20 = smul.addr %s13, 8
      %s21 = scalar_lea.hbm %s0, %s20
      %s22 = smul.u32 8, %s14
      %s23 = sshll.u32 %s21, 4
      %s24 = int_to_ptr.hbm [resolvable:$true] %s23
      %s25 = sshll.u32 [#allocation2], 4
      %s26 = int_to_ptr.vmem [resolvable:$true] %s25
      %s27 = sshll.u32 %s22, 4
      %31 = dma.hbm_to_vmem [thread:$0]  (%p19), %s24, %s27, %s26, [#allocation3], 128, 128, 8
    $region5: #{tpu_custom_call.1} parent=1 // pred_fallthru
      _
    // Predicated region
    $region6: #{tpu_custom_call.1} parent=1 // pred_check
      _
    $region7: #{tpu_custom_call.1} parent=1 // pred_check_branch
      %33 = sbr.rel (0) target = $region9
    $region8: #{tpu_custom_call.1} parent=1 // pred_region
      %s34 = sadd.s32 0, 0
      %s35 = smul.u32 8, %s34
      %s36 = ssub.s32 2, %s35
      %s37 = smul.u32 8, %s36
      %s38 = ssub.s32 64, %s37
      %s39 = sshll.u32 %s38, 4
      %40 = vsyncadd [#allocation6], %s39
      %p41 = scmp.ne.s32.totalorder 0, %s37
      %s42 = smul.addr %s35, 8
      %s43 = scalar_lea.hbm %s1, %s42
      %s44 = smul.u32 8, %s36
      %s45 = sshll.u32 %s43, 4
      %s46 = int_to_ptr.hbm [resolvable:$true] %s45
      %s47 = sshll.u32 [#allocation5], 4
      %s48 = int_to_ptr.vmem [resolvable:$true] %s47
      %s49 = sshll.u32 %s44, 4
      %53 = dma.hbm_to_vmem [thread:$0]  (%p41), %s46, %s49, %s48, [#allocation6], 128, 128, 8
    $region9: #{tpu_custom_call.1} parent=1 // pred_fallthru
      _
    // Predicated region
    $region10: #{tpu_custom_call.1} parent=1 // pred_check
      _
    $region11: #{tpu_custom_call.1} parent=1 // pred_check_branch
      %55 = sbr.rel (0) target = $region13
    $region12: #{tpu_custom_call.1} parent=1 // pred_region
      %57 = dma.done [#allocation3], 1024
    $region13: #{tpu_custom_call.1} parent=1 // pred_fallthru
      _
    // Predicated region
    $region14: #{tpu_custom_call.1} parent=1 // pred_check
      _
    $region15: #{tpu_custom_call.1} parent=1 // pred_check_branch
      %59 = sbr.rel (0) target = $region17
    $region16: #{tpu_custom_call.1} parent=1 // pred_region
      %61 = dma.done [#allocation6], 1024
    $region17: #{tpu_custom_call.1} parent=1 // pred_fallthru
      _
    %s62 = sadd.s32 0, 0
    %s63 = smul.u32 8, %s62
    %s64 = ssub.s32 2, %s63
    %s65 = smul.u32 8, %s64
    %s66 = sadd.s32 0, 0
    %s67 = smul.u32 8, %s66
    %s68 = ssub.s32 2, %s67
    %s69 = smul.u32 8, %s68
    %p70 = scmp.eq.s32.totalorder 0, 0
    // Predicated region
    $region18: #{tpu_custom_call.1} parent=1 // pred_check
      %p71 = pneg %p70
    $region19: #{tpu_custom_call.1} parent=1 // pred_check_branch
      %73 = sbr.rel (%p71) target = $region21
    $region20: #{tpu_custom_call.1} parent=1 // pred_region
      %74 = vst [vmem:[#allocation7] sm:$0xff] 0.0
      %75 = vst [vmem:[#allocation7 + $0x8] sm:$0xff] 0.0
      %76 = vst [vmem:[#allocation7 + $0x10] sm:$0xff] 0.0
      %77 = vst [vmem:[#allocation7 + $0x18] sm:$0xff] 0.0
      %78 = vst [vmem:[#allocation7 + $0x20] sm:$0xff] 0.0
      %79 = vst [vmem:[#allocation7 + $0x28] sm:$0xff] 0.0
      %80 = vst [vmem:[#allocation7 + $0x30] sm:$0xff] 0.0
      %81 = vst [vmem:[#allocation7 + $0x38] sm:$0xff] 0.0
    $region21: #{tpu_custom_call.1} parent=1 // pred_fallthru
      _
    %s82 = sadd.s32 0, 0
    %p83 = scmp.lt.s32.totalorder %s82, 0
    // Predicated region
    $region22: #{tpu_custom_call.1} parent=1 // pred_check
      %p84 = pneg %p83
    $region23: #{tpu_custom_call.1} parent=1 // pred_check_branch
      %86 = sbr.rel (%p84) target = $region25
    $region24: #{tpu_custom_call.1} parent=1 // pred_region
      %v87 = vld [vmem:[#allocation2] sm:$0xff]
      %v88 = vld [vmem:[#allocation2 + $0x8] sm:$0xff]
      %v89 = vld [vmem:[#allocation2 + $0x10] sm:$0xff]
      %v90 = vld [vmem:[#allocation2 + $0x18] sm:$0xff]
      %v91 = vld [vmem:[#allocation2 + $0x20] sm:$0xff]
      %v92 = vld [vmem:[#allocation2 + $0x28] sm:$0xff]
      %v93 = vld [vmem:[#allocation2 + $0x30] sm:$0xff]
      %v94 = vld [vmem:[#allocation2 + $0x38] sm:$0xff]
      %v95 = vld [vmem:[#allocation5] sm:$0xff]
      %v96 = vld [vmem:[#allocation5 + $0x8] sm:$0xff]
      %v97 = vld [vmem:[#allocation5 + $0x10] sm:$0xff]
      %v98 = vld [vmem:[#allocation5 + $0x18] sm:$0xff]
      %v99 = vld [vmem:[#allocation5 + $0x20] sm:$0xff]
      %v100 = vld [vmem:[#allocation5 + $0x28] sm:$0xff]
      %v101 = vld [vmem:[#allocation5 + $0x30] sm:$0xff]
      %v102 = vld [vmem:[#allocation5 + $0x38] sm:$0xff]
      %v103 = vsub.f32 %v87, %v95
      %v104 = vsub.f32 %v88, %v96
      %v105 = vsub.f32 %v89, %v97
      %v106 = vsub.f32 %v90, %v98
      %v107 = vsub.f32 %v91, %v99
      %v108 = vsub.f32 %v92, %v100
      %v109 = vsub.f32 %v93, %v101
      %v110 = vsub.f32 %v94, %v102
      %v111 = vmul.f32 %v103, %v103
      %v112 = vmul.f32 %v104, %v104
      %v113 = vmul.f32 %v105, %v105
      %v114 = vmul.f32 %v106, %v106
      %v115 = vmul.f32 %v107, %v107
      %v116 = vmul.f32 %v108, %v108
      %v117 = vmul.f32 %v109, %v109
      %v118 = vmul.f32 %v110, %v110
      %v119 = vadd.f32 %v111, 0.0
      %v120 = vadd.f32 %v112, 0.0
      %v121 = vadd.f32 %v113, 0.0
      %v122 = vadd.f32 %v114, 0.0
      %v123 = vadd.f32 %v115, 0.0
      %v124 = vadd.f32 %v116, 0.0
      %v125 = vadd.f32 %v117, 0.0
      %v126 = vadd.f32 %v118, 0.0
      %v127 = vadd.f32 %v119, 0.0
      %v128 = vadd.f32 %v120, 0.0
      %v129 = vadd.f32 %v121, 0.0
      %v130 = vadd.f32 %v122, 0.0
      %v131 = vadd.f32 %v123, 0.0
      %v132 = vadd.f32 %v124, 0.0
      %v133 = vadd.f32 %v125, 0.0
      %v134 = vadd.f32 %v126, 0.0
      %v135 = vld [vmem:[#allocation7] sm:$0xff]
      %v136 = vld [vmem:[#allocation7 + $0x8] sm:$0xff]
      %v137 = vld [vmem:[#allocation7 + $0x10] sm:$0xff]
      %v138 = vld [vmem:[#allocation7 + $0x18] sm:$0xff]
      %v139 = vld [vmem:[#allocation7 + $0x20] sm:$0xff]
      %v140 = vld [vmem:[#allocation7 + $0x28] sm:$0xff]
      %v141 = vld [vmem:[#allocation7 + $0x30] sm:$0xff]
      %v142 = vld [vmem:[#allocation7 + $0x38] sm:$0xff]
      %v143 = vadd.f32 %v135, %v127
      %v144 = vadd.f32 %v136, %v128
      %v145 = vadd.f32 %v137, %v129
      %v146 = vadd.f32 %v138, %v130
      %v147 = vadd.f32 %v139, %v131
      %v148 = vadd.f32 %v140, %v132
      %v149 = vadd.f32 %v141, %v133
      %v150 = vadd.f32 %v142, %v134
      %151 = vst [vmem:[#allocation7] sm:$0xff] %v143
      %152 = vst [vmem:[#allocation7 + $0x8] sm:$0xff] %v144
      %153 = vst [vmem:[#allocation7 + $0x10] sm:$0xff] %v145
      %154 = vst [vmem:[#allocation7 + $0x18] sm:$0xff] %v146
      %155 = vst [vmem:[#allocation7 + $0x20] sm:$0xff] %v147
      %156 = vst [vmem:[#allocation7 + $0x28] sm:$0xff] %v148
      %157 = vst [vmem:[#allocation7 + $0x30] sm:$0xff] %v149
      %158 = vst [vmem:[#allocation7 + $0x38] sm:$0xff] %v150
    $region25: #{tpu_custom_call.1} parent=1 // pred_fallthru
      _
    %p159 = scmp.eq.s32.totalorder %s82, 0
    // Predicated region
    $region26: #{tpu_custom_call.1} parent=1 // pred_check
      %p160 = pneg %p159
    $region27: #{tpu_custom_call.1} parent=1 // pred_check_branch
      %162 = sbr.rel (%p160) target = $region29
    $region28: #{tpu_custom_call.1} parent=1 // pred_region
      %v163 = vld [vmem:[#allocation2] sm:$0xff]
      %v164 = vld [vmem:[#allocation2 + $0x8] sm:$0xff]
      %v165 = vld [vmem:[#allocation2 + $0x10] sm:$0xff]
      %v166 = vld [vmem:[#allocation2 + $0x18] sm:$0xff]
      %v167 = vld [vmem:[#allocation2 + $0x20] sm:$0xff]
      %v168 = vld [vmem:[#allocation2 + $0x28] sm:$0xff]
      %v169 = vld [vmem:[#allocation2 + $0x30] sm:$0xff]
      %v170 = vld [vmem:[#allocation2 + $0x38] sm:$0xff]
      %v171 = vld [vmem:[#allocation5] sm:$0xff]
      %v172 = vld [vmem:[#allocation5 + $0x8] sm:$0xff]
      %v173 = vld [vmem:[#allocation5 + $0x10] sm:$0xff]
      %v174 = vld [vmem:[#allocation5 + $0x18] sm:$0xff]
      %v175 = vld [vmem:[#allocation5 + $0x20] sm:$0xff]
      %v176 = vld [vmem:[#allocation5 + $0x28] sm:$0xff]
      %v177 = vld [vmem:[#allocation5 + $0x30] sm:$0xff]
      %v178 = vld [vmem:[#allocation5 + $0x38] sm:$0xff]
      %v179 = vsub.f32 %v163, %v171
      %v180 = vsub.f32 %v164, %v172
      %v181 = vsub.f32 %v165, %v173
      %v182 = vsub.f32 %v166, %v174
      %v183 = vsub.f32 %v167, %v175
      %v184 = vsub.f32 %v168, %v176
      %v185 = vsub.f32 %v169, %v177
      %v186 = vsub.f32 %v170, %v178
      %v187 = vmul.f32 %v179, %v179
      %v188 = vmul.f32 %v180, %v180
      %v189 = vmul.f32 %v181, %v181
      %v190 = vmul.f32 %v182, %v182
      %v191 = vmul.f32 %v183, %v183
      %v192 = vmul.f32 %v184, %v184
      %v193 = vmul.f32 %v185, %v185
      %v194 = vmul.f32 %v186, %v186
      %v195 = vlaneseq
      %v196 = vshrl.u32 %v195, 7
      %v197 = vadd.s32 %v196, 8
      %v198 = vadd.s32 %v196, 16
      %v199 = vadd.s32 %v196, 24
      %v200 = vadd.s32 %v196, 32
      %v201 = vadd.s32 %v196, 40
      %v202 = vadd.s32 %v196, 48
      %v203 = vadd.s32 %v196, 56
      %v204 = vstv 0
      %v205 = vadd.s32 %v204, %v196
      %v206 = vadd.s32 %v204, %v197
      %v207 = vadd.s32 %v204, %v198
      %v208 = vadd.s32 %v204, %v199
      %v209 = vadd.s32 %v204, %v200
      %v210 = vadd.s32 %v204, %v201
      %v211 = vadd.s32 %v204, %v202
      %v212 = vadd.s32 %v204, %v203
      %vm213 = vcmp.lt.s32.totalorder %v205, 16
      %vm214 = vcmp.lt.s32.totalorder %v206, 16
      %vm215 = vcmp.lt.s32.totalorder %v207, 16
      %vm216 = vcmp.lt.s32.totalorder %v208, 16
      %vm217 = vcmp.lt.s32.totalorder %v209, 16
      %vm218 = vcmp.lt.s32.totalorder %v210, 16
      %vm219 = vcmp.lt.s32.totalorder %v211, 16
      %vm220 = vcmp.lt.s32.totalorder %v212, 16
      %v221 = vsel %vm213, %v187, 0.0
      %v222 = vsel %vm214, %v188, 0.0
      %v223 = vsel %vm215, %v189, 0.0
      %v224 = vsel %vm216, %v190, 0.0
      %v225 = vsel %vm217, %v191, 0.0
      %v226 = vsel %vm218, %v192, 0.0
      %v227 = vsel %vm219, %v193, 0.0
      %v228 = vsel %vm220, %v194, 0.0
      %v229 = vadd.f32 %v221, 0.0
      %v230 = vadd.f32 %v222, 0.0
      %v231 = vadd.f32 %v223, 0.0
      %v232 = vadd.f32 %v224, 0.0
      %v233 = vadd.f32 %v225, 0.0
      %v234 = vadd.f32 %v226, 0.0
      %v235 = vadd.f32 %v227, 0.0
      %v236 = vadd.f32 %v228, 0.0
      %v237 = vadd.f32 %v229, 0.0
      %v238 = vadd.f32 %v230, 0.0
      %v239 = vadd.f32 %v231, 0.0
      %v240 = vadd.f32 %v232, 0.0
      %v241 = vadd.f32 %v233, 0.0
      %v242 = vadd.f32 %v234, 0.0
      %v243 = vadd.f32 %v235, 0.0
      %v244 = vadd.f32 %v236, 0.0
      %v245 = vld [vmem:[#allocation7] sm:$0xff]
      %v246 = vld [vmem:[#allocation7 + $0x8] sm:$0xff]
      %v247 = vld [vmem:[#allocation7 + $0x10] sm:$0xff]
      %v248 = vld [vmem:[#allocation7 + $0x18] sm:$0xff]
      %v249 = vld [vmem:[#allocation7 + $0x20] sm:$0xff]
      %v250 = vld [vmem:[#allocation7 + $0x28] sm:$0xff]
      %v251 = vld [vmem:[#allocation7 + $0x30] sm:$0xff]
      %v252 = vld [vmem:[#allocation7 + $0x38] sm:$0xff]
      %v253 = vadd.f32 %v245, %v237
      %v254 = vadd.f32 %v246, %v238
      %v255 = vadd.f32 %v247, %v239
      %v256 = vadd.f32 %v248, %v240
      %v257 = vadd.f32 %v249, %v241
      %v258 = vadd.f32 %v250, %v242
      %v259 = vadd.f32 %v251, %v243
      %v260 = vadd.f32 %v252, %v244
      %261 = vst [vmem:[#allocation7] sm:$0xff] %v253
      %262 = vst [vmem:[#allocation7 + $0x8] sm:$0xff] %v254
      %263 = vst [vmem:[#allocation7 + $0x10] sm:$0xff] %v255
      %264 = vst [vmem:[#allocation7 + $0x18] sm:$0xff] %v256
      %265 = vst [vmem:[#allocation7 + $0x20] sm:$0xff] %v257
      %266 = vst [vmem:[#allocation7 + $0x28] sm:$0xff] %v258
      %267 = vst [vmem:[#allocation7 + $0x30] sm:$0xff] %v259
      %268 = vst [vmem:[#allocation7 + $0x38] sm:$0xff] %v260
    $region29: #{tpu_custom_call.1} parent=1 // pred_fallthru
      _
    // Predicated region
    $region30: #{tpu_custom_call.1} parent=1 // pred_check
      _
    $region31: #{tpu_custom_call.1} parent=1 // pred_check_branch
      %270 = sbr.rel (0) target = $region33
    $region32: #{tpu_custom_call.1} parent=1 // pred_region
      %272 = vsyncadd [#allocation4], 0
      %s273 = sshll.u32 [#allocation7], 4
      %s274 = int_to_ptr.vmem [resolvable:$true] %s273
      %s275 = sshll.u32 %s2, 4
      %s276 = int_to_ptr.hbm [resolvable:$true] %s275
      %281 = dma.vmem_to_hbm [thread:$0]  %s274, 1024, %s276, [#allocation4], 128, 128, 8
    $region33: #{tpu_custom_call.1} parent=1 // pred_fallthru
      _
    // Predicated region
    $region34: #{tpu_custom_call.1} parent=1 // pred_check
      _
    $region35: #{tpu_custom_call.1} parent=1 // pred_check_branch
      %283 = sbr.rel (0) target = $region37
    $region36: #{tpu_custom_call.1} parent=1 // pred_region
      %285 = dma.done [#allocation4], 1024
    $region37: #{tpu_custom_call.1} parent=1 // pred_fallthru
      _
    %286 = vsyncpa [#allocation3], 1
    %287 = vsyncpa [#allocation6], 1
    %288 = vsyncpa [#allocation4], 1

</llo_original>
